<compile_context>
chip_gen: v6e
topology: v6e:2x2x1
jax: 0.10.0
libtpu: 0.0.40
codegen_flags: <defaults>
</compile_context>

<pallas_src>
import functools
import math

import jax
import jax.numpy as jnp
from jax.experimental import pallas as pl
from jax.experimental.pallas import tpu as pltpu


# ------------------------------- helpers ----------------------------------- #

_TM_CANDIDATES = (512, 256, 128, 64, 32, 16, 8)
_TN_CANDIDATES = (512, 256, 128)
_TK_CANDIDATES = (1024, 512, 256, 128)


def _round_up(x, m):
    return ((x + m - 1) // m) * m


def _pick_tile(dim_padded, candidates):
    """Largest candidate tile that evenly divides `dim_padded`."""
    for c in candidates:
        if c <= dim_padded and dim_padded % c == 0:
            return c
    return dim_padded


def _vmem_limit_bytes(tm, tk, tn, kp, npad):
    """Scoped-VMEM budget for the double-buffered pipeline (+headroom)."""
    dbl = 2
    xb = dbl * tm * tk * 4          # x tile, f32
    wb = dbl * tk * tn * 2          # W tile, bf16
    sb = dbl * 8 * kp * 4           # scale vector (sublane-padded), f32
    bb = dbl * 8 * npad * 4         # bias vector (sublane-padded), f32
    ob = dbl * tm * tn * 4          # output tile, f32
    ab = tm * tn * 4                # accumulator scratch, f32
    total = xb + wb + sb + bb + ob + ab
    return int(min(max(2 * total, 16 * 1024 * 1024), 48 * 1024 * 1024))


# ----------------------------- Pallas kernels ------------------------------ #

def _linear_rf_train_kernel(x_ref, s_ref, w_ref, b_ref, o_ref, acc_ref):
    """Fused training tile: acc(k=0)=b ; acc += (x*s).bf16 @ W.bf16 ; out at last k.

    s = (1-mask)/(1-r) + mask/r (per input column), b pre-scaled by
    (1/(1-r) + 1/r) in the wrapper, so one MXU matmul reproduces the
    two-branch PyTorch computation.
    """
    j = pl.program_id(1)
    k = pl.program_id(2)
    tm, tk = x_ref.shape
    tn = o_ref.shape[1]

    @pl.when(k == 0)
    def _init():
        b = b_ref[:, pl.ds(pl.multiple_of(j * tn, 128), tn)]        # (1, tn)
        acc_ref[...] = jnp.broadcast_to(b, acc_ref.shape)

    s = s_ref[:, pl.ds(pl.multiple_of(k * tk, 128), tk)]            # (1, tk)
    xs = (x_ref[...] * s).astype(jnp.bfloat16)                      # scale in f32
    acc_ref[...] += jnp.dot(xs, w_ref[...],
                            preferred_element_type=jnp.float32)

    @pl.when(k == pl.num_programs(2) - 1)
    def _finalize():
        o_ref[...] = acc_ref[...].astype(o_ref.dtype)


def _linear_eval_kernel(x_ref, w_ref, b_ref, o_ref, acc_ref):
    """Eval tile: plain tiled linear, bf16 MXU inputs, f32 accumulation."""
    j = pl.program_id(1)
    k = pl.program_id(2)
    tn = o_ref.shape[1]

    @pl.when(k == 0)
    def _init():
        b = b_ref[:, pl.ds(pl.multiple_of(j * tn, 128), tn)]
        acc_ref[...] = jnp.broadcast_to(b, acc_ref.shape)

    acc_ref[...] += jnp.dot(x_ref[...].astype(jnp.bfloat16), w_ref[...],
                            preferred_element_type=jnp.float32)

    @pl.when(k == pl.num_programs(2) - 1)
    def _finalize():
        o_ref[...] = acc_ref[...].astype(o_ref.dtype)


# --------------------------- jitted forward fns ----------------------------- #

def _select_tiles(mp, kp, npad, tk, tn):
    tm = _pick_tile(mp, _TM_CANDIDATES)
    # v7x megacore: if M has only one block, try to give the N axis >= 2 blocks.
    tn_eff = tn
    if mp // tm < 2:
        while npad // tn_eff < 2 and tn_eff > 128 and npad % (tn_eff // 2) == 0:
            tn_eff //= 2
    return tm, tk, tn_eff


def _train_forward(x, w_pad, b_scaled, mask_key, *,
                   cin, cout, kp, npad, r, division_idx, tk, tn):
    m = x.shape[0]
    mp = _round_up(m, 8)
    if mp != m or kp != cin:
        x = jnp.pad(x, ((0, mp - m), (0, kp - cin)))

    tm, tk, tn = _select_tiles(mp, kp, npad, tk, tn)
    grid = (mp // tm, npad // tn, kp // tk)

    # torch.randperm analogue (deterministic via explicit key).
    perm = jax.random.permutation(mask_key, cin)
    mask = jnp.zeros((cin,), jnp.float32).at[perm[:division_idx]].set(1.0)
    # Per-column scale folding both branches into one matmul.
    scale = (1.0 - mask) / (1.0 - r) + mask / r
    scale = jnp.pad(scale, (0, kp - cin)).reshape(1, kp)

    out_p = pl.pallas_call(
        _linear_rf_train_kernel,
        out_shape=jax.ShapeDtypeStruct((mp, npad), x.dtype),
        grid_spec=pltpu.PrefetchScalarGridSpec(
            num_scalar_prefetch=0,
            grid=grid,
            in_specs=[
                pl.BlockSpec((tm, tk), lambda i, j, k: (i, k)),   # x (f32)
                pl.BlockSpec((1, kp), lambda i, j, k: (0, 0)),    # scale (whole)
                pl.BlockSpec((tk, tn), lambda i, j, k: (k, j)),   # W^T (bf16)
                pl.BlockSpec((1, npad), lambda i, j, k: (0, 0)),  # bias (whole)
            ],
            out_specs=pl.BlockSpec((tm, tn), lambda i, j, k: (i, j)),
            scratch_shapes=[pltpu.VMEM((tm, tn), jnp.float32)],
        ),
        compiler_params=pltpu.CompilerParams(
            dimension_semantics=("parallel", "parallel", "arbitrary"),
            vmem_limit_bytes=_vmem_limit_bytes(tm, tk, tn, kp, npad)),
    )(x, scale, w_pad, b_scaled)

    return out_p[:m, :cout]


def _eval_forward(x, w_pad, b_pad, *, cin, cout, kp, npad, tk, tn):
    m = x.shape[0]
    mp = _round_up(m, 8)
    if mp != m or kp != cin:
        x = jnp.pad(x, ((0, mp - m), (0, kp - cin)))

    tm, tk, tn = _select_tiles(mp, kp, npad, tk, tn)
    grid = (mp // tm, npad // tn, kp // tk)

    out_p = pl.pallas_call(
        _linear_eval_kernel,
        out_shape=jax.ShapeDtypeStruct((mp, npad), x.dtype),
        grid_spec=pltpu.PrefetchScalarGridSpec(
            num_scalar_prefetch=0,
            grid=grid,
            in_specs=[
                pl.BlockSpec((tm, tk), lambda i, j, k: (i, k)),   # x (f32)
                pl.BlockSpec((tk, tn), lambda i, j, k: (k, j)),   # W^T (bf16)
                pl.BlockSpec((1, npad), lambda i, j, k: (0, 0)),  # bias (whole)
            ],
            out_specs=pl.BlockSpec((tm, tn), lambda i, j, k: (i, j)),
            scratch_shapes=[pltpu.VMEM((tm, tn), jnp.float32)],
        ),
        compiler_params=pltpu.CompilerParams(
            dimension_semantics=("parallel", "parallel", "arbitrary"),
            vmem_limit_bytes=_vmem_limit_bytes(tm, tk, tn, kp, npad)),
    )(x, w_pad, b_pad)

    return out_p[:m, :cout]


# ------------------------------ Module wrapper ------------------------------ #

class LinearRF:
    """JAX/Pallas port of the PyTorch Linear_RF module."""

    def __init__(self, in_channels, out_channels, division_rate, key):
        assert 0.0 < float(division_rate) < 1.0, \
            "division_rate must be strictly between 0 and 1"
        self.in_channels = in_channels
        self.out_channels = out_channels
        self.division_rate = float(division_rate)
        self.training = True

        # Deterministic init mirroring nn.Linear's uniform(-1/sqrt(in), 1/sqrt(in)).
        kw, kb = jax.random.split(key)
        bound = 1.0 / math.sqrt(in_channels)
        self.weight = jax.random.uniform(
            kw, (out_channels, in_channels), jnp.float32, -bound, bound)
        self.bias = jax.random.uniform(
            kb, (out_channels,), jnp.float32, -bound, bound)

        # Padded, pre-transposed parameters (built once, not per call).
        self._kp = _round_up(in_channels, 128)           # padded Cin
        self._np = _round_up(out_channels, 128)          # padded Cout
        self._tk = _pick_tile(self._kp, _TK_CANDIDATES)
        self._tn = _pick_tile(self._np, _TN_CANDIDATES)

        w_t = self.weight.T                               # (Cin, Cout)
        self._w_pad = jnp.pad(
            w_t, ((0, self._kp - in_channels), (0, self._np - out_channels))
        ).astype(jnp.bfloat16)                            # bf16 MXU operand
        self._b_pad = jnp.pad(
            self.bias, (0, self._np - out_channels)).reshape(1, self._np)
        r = self.division_rate
        self._b_scaled = self._b_pad * (1.0 / (1.0 - r) + 1.0 / r)

        division_idx = int(in_channels * r)               # matches torch's int()

        common = dict(cin=in_channels, cout=out_channels,
                      kp=self._kp, npad=self._np, tk=self._tk, tn=self._tn)
        self._train_fn = jax.jit(functools.partial(
            _train_forward, r=r, division_idx=division_idx, **common))
        self._eval_fn = jax.jit(functools.partial(_eval_forward, **common))

    # ------------------------------------------------------------------ #
    def __call__(self, x, mask_key=None):
        assert x.ndim == 2 and x.shape[1] == self.in_channels
        if self.training:
            if mask_key is None:
                raise ValueError("training-mode forward requires mask_key")
            return self._train_fn(x, self._w_pad, self._b_scaled, mask_key)
        return self._eval_fn(x, self._w_pad, self._b_pad)


# ---------------------------------- main ------------------------------------ #

if __name__ == "__main__":
    key = jax.random.PRNGKey(0)
    k_param, k_x, k_mask = jax.random.split(key, 3)

    in_channels, out_channels, division_rate = 32, 16, 0.5
    batch = 8

    module = LinearRF(in_channels, out_channels, division_rate, k_param)
    x = jax.random.normal(k_x, (batch, in_channels), jnp.float32)

    # ---- training-mode forward (the interesting path) ----
    module.training = True
    out_train = module(x, mask_key=k_mask)
    out_train = jax.block_until_ready(out_train)

    # Reference (plain JAX, f32), same mask, original two-branch formulation.
    perm = jax.random.permutation(k_mask, in_channels)
    division_idx = int(in_channels * division_rate)
    mask = jnp.zeros((in_channels,), jnp.float32).at[perm[:division_idx]].set(1.0)
    xs = x * (1.0 - mask)[None, :]
    xt = x * mask[None, :]
    ref_train = ((xs @ module.weight.T + module.bias) / (1.0 - division_rate)
                 + (xt @ module.weight.T + module.bias) / division_rate)
    # bf16 weights in the kernel -> loosened tolerance vs. f32 reference.
    assert jnp.allclose(out_train, ref_train, atol=2e-2, rtol=2e-2), \
        float(jnp.max(jnp.abs(out_train - ref_train)))

    # ---- eval-mode forward ----
    module.training = False
    out_eval = module(x)
    out_eval = jax.block_until_ready(out_eval)
    ref_eval = x @ module.weight.T + module.bias
    assert jnp.allclose(out_eval, ref_eval, atol=2e-2, rtol=2e-2), \
        float(jnp.max(jnp.abs(out_eval - ref_eval)))

    print("KERNEL_OK")
</pallas_src>

<mosaic_0001>
module attributes {stable_mosaic.version = 11 : i64} {
  func.func @_linear_rf_train_kernel(%arg0: i32, %arg1: i32, %arg2: i32, %arg3: memref<8x128xf32, #tpu.memory_space<vmem>>, %arg4: memref<1x128xf32, #tpu.memory_space<vmem>>, %arg5: memref<128x128xbf16, #tpu.memory_space<vmem>>, %arg6: memref<1x128xf32, #tpu.memory_space<vmem>>, %arg7: memref<8x128xf32, #tpu.memory_space<vmem>>, %arg8: memref<8x128xf32, #tpu.memory_space<vmem>>) attributes {dimension_semantics = [#tpu.dimension_semantics<parallel>, #tpu.dimension_semantics<parallel>, #tpu.dimension_semantics<arbitrary>], iteration_bounds = array<i64: 1, 1, 1>, scalar_prefetch = 0 : i64, scratch_operands = 1 : i64, tpu.core_type = #tpu.core_type<tc>, window_params = [{transform_indices = @transform_0, window_bounds = array<i64: 8, 128>}, {pipeline_mode = #tpu.pipeline_mode<synchronous>, transform_indices = @transform_1, window_bounds = array<i64: 1, 128>}, {transform_indices = @transform_2, window_bounds = array<i64: 128, 128>}, {pipeline_mode = #tpu.pipeline_mode<synchronous>, transform_indices = @transform_3, window_bounds = array<i64: 1, 128>}, {transform_indices = @transform_4, window_bounds = array<i64: 8, 128>}]} {
    %c0_i32 = arith.constant 0 : i32
    %0 = arith.cmpi eq, %arg2, %c0_i32 : i32
    %1 = arith.extui %0 : i1 to i32
    %c0_i32_0 = arith.constant 0 : i32
    %2 = arith.cmpi ne, %1, %c0_i32_0 : i32
    scf.if %2 {
      %c128_i32_11 = arith.constant 128 : i32
      %19 = arith.muli %arg1, %c128_i32_11 : i32
      %20 = tpu.assume_multiple %19, 128 : i32
      %c0_12 = arith.constant 0 : index
      %21 = arith.index_cast %20 : i32 to index
      %22 = vector.load %arg6[%c0_12, %21] : memref<1x128xf32, #tpu.memory_space<vmem>>, vector<1x128xf32>
      %23 = vector.shape_cast %22 : vector<1x128xf32> to vector<1x128xf32>
      %24 = vector.broadcast %23 : vector<1x128xf32> to vector<8x128xf32>
      %c0_13 = arith.constant 0 : index
      %c0_14 = arith.constant 0 : index
      %25 = vector.load %arg8[%c0_13, %c0_14] : memref<8x128xf32, #tpu.memory_space<vmem>>, vector<8x128xf32>
      tpu.vector_store %arg8[%c0_13, %c0_14], %24 {strides = array<i32>} : memref<8x128xf32, #tpu.memory_space<vmem>>, vector<8x128xf32>,
    } else {
    }
    %c128_i32 = arith.constant 128 : i32
    %3 = arith.muli %arg2, %c128_i32 : i32
    %4 = tpu.assume_multiple %3, 128 : i32
    %c0 = arith.constant 0 : index
    %5 = arith.index_cast %4 : i32 to index
    %6 = vector.load %arg4[%c0, %5] : memref<1x128xf32, #tpu.memory_space<vmem>>, vector<1x128xf32>
    %c0_1 = arith.constant 0 : index
    %c0_2 = arith.constant 0 : index
    %7 = vector.load %arg3[%c0_1, %c0_2] : memref<8x128xf32, #tpu.memory_space<vmem>>, vector<8x128xf32>
    %8 = vector.broadcast %6 : vector<1x128xf32> to vector<8x128xf32>
    %9 = arith.mulf %7, %8 : vector<8x128xf32>
    %10 = arith.truncf %9 : vector<8x128xf32> to vector<8x128xbf16>
    %c0_3 = arith.constant 0 : index
    %c0_4 = arith.constant 0 : index
    %11 = vector.load %arg8[%c0_3, %c0_4] : memref<8x128xf32, #tpu.memory_space<vmem>>, vector<8x128xf32>
    %c0_5 = arith.constant 0 : index
    %c0_6 = arith.constant 0 : index
    %12 = vector.load %arg5[%c0_5, %c0_6] : memref<128x128xbf16, #tpu.memory_space<vmem>>, vector<128x128xbf16>
    %cst = arith.constant dense<0.000000e+00> : vector<8x128xf32>
    %13 = tpu.matmul %10, %12, %cst {dimension_numbers = #tpu.dot_dimension_numbers<[1], [0], [0], [1], [0, 0, 1, 1], [], []>} : vector<8x128xbf16>, vector<128x128xbf16>, vector<8x128xf32> -> vector<8x128xf32>
    %14 = arith.addf %11, %13 : vector<8x128xf32>
    %c0_7 = arith.constant 0 : index
    %c0_8 = arith.constant 0 : index
    %15 = vector.load %arg8[%c0_7, %c0_8] : memref<8x128xf32, #tpu.memory_space<vmem>>, vector<8x128xf32>
    tpu.vector_store %arg8[%c0_7, %c0_8], %14 {strides = array<i32>} : memref<8x128xf32, #tpu.memory_space<vmem>>, vector<8x128xf32>,
    %c0_i32_9 = arith.constant 0 : i32
    %16 = arith.cmpi eq, %arg2, %c0_i32_9 : i32
    %17 = arith.extui %16 : i1 to i32
    %c0_i32_10 = arith.constant 0 : i32
    %18 = arith.cmpi ne, %17, %c0_i32_10 : i32
    scf.if %18 {
      %c0_11 = arith.constant 0 : index
      %c0_12 = arith.constant 0 : index
      %19 = vector.load %arg8[%c0_11, %c0_12] : memref<8x128xf32, #tpu.memory_space<vmem>>, vector<8x128xf32>
      %c0_13 = arith.constant 0 : index
      %c0_14 = arith.constant 0 : index
      %20 = vector.load %arg7[%c0_13, %c0_14] : memref<8x128xf32, #tpu.memory_space<vmem>>, vector<8x128xf32>
      tpu.vector_store %arg7[%c0_13, %c0_14], %19 {strides = array<i32>} : memref<8x128xf32, #tpu.memory_space<vmem>>, vector<8x128xf32>,
    } else {
    }
    return
  }
  func.func @transform_0(%arg0: i32, %arg1: i32, %arg2: i32) -> (i32, i32) {
    %c0_i32 = arith.constant 0 : i32
    return %arg0, %arg2 : i32, i32
  }
  func.func @transform_1(%arg0: i32, %arg1: i32, %arg2: i32) -> (i32, i32) {
    %c0_i32 = arith.constant 0 : i32
    %c0_i32_0 = arith.constant 0 : i32
    %c0_i32_1 = arith.constant 0 : i32
    return %c0_i32, %c0_i32_0 : i32, i32
  }
  func.func @transform_2(%arg0: i32, %arg1: i32, %arg2: i32) -> (i32, i32) {
    %c0_i32 = arith.constant 0 : i32
    return %arg2, %arg1 : i32, i32
  }
  func.func @transform_3(%arg0: i32, %arg1: i32, %arg2: i32) -> (i32, i32) {
    %c0_i32 = arith.constant 0 : i32
    %c0_i32_0 = arith.constant 0 : i32
    %c0_i32_1 = arith.constant 0 : i32
    return %c0_i32, %c0_i32_0 : i32, i32
  }
  func.func @transform_4(%arg0: i32, %arg1: i32, %arg2: i32) -> (i32, i32) {
    %c0_i32 = arith.constant 0 : i32
    return %arg0, %arg1 : i32, i32
  }
}

</mosaic_0001>

<llo_original>
// kernel: _train_forward.1
$region0: #{_train_forward.1}
  #allocation0 [shape = 'u32[]', space=smem, size = 0x4, offset = 0x4, fixed_abs, tag = 'smem constant byte address 0x4 - core index']
  #allocation1 [shape = 'u32[144,128]{1,0:T(1,128)}', space=vmem, size = 0x12000, scoped, tag = 'internal scratch']
  #allocation2 [shape = 'f32[8,128]{1,0:T(8,128)}', space=vmem, size = 0x1000, scoped, tag = 'scratch operand']
  %s0 = inlined_call_operand.vmem [shape: f32[8,128], index: 0, kind: input, shape index: {}]
  %s1 = inlined_call_operand.vmem [shape: f32[1,128], index: 1, kind: input, shape index: {}]
  %s2 = inlined_call_operand.vmem [shape: bf16[128,128], index: 2, kind: input, shape index: {}]
  %s3 = inlined_call_operand.vmem [shape: f32[1,128], index: 3, kind: input, shape index: {}]
  %s4 = inlined_call_operand.hbm [shape: f32[8,128], index: 4, kind: output, shape index: {}]
  %s5 = sld [smem:[#allocation0]]
  $region34: #{_train_forward.1} parent=0
    _
  %s7 = ssub.s32 1, %s5
  %s8 = scalar_select 0, %s7, %s5
  $region1: #{_train_forward.1} parent=0
    #allocation3 [shape = 'u8[4096]{0}', space=vmem, size = 0x1000, scoped, tag = 'output window, operand 0, single buffered']
    #allocation4 [shape = 's32[1]{0}', space=sflag, size = 0x4, scoped, tag = 'scoped memory for _train_forward.1']
    %9 = vsyncpa [#allocation4], 0
    // Predicated region
    $region2: #{_train_forward.1} parent=1 // pred_check
      _
    $region3: #{_train_forward.1} parent=1 // pred_check_branch
      %11 = sbr.rel (0) target = $region5
    $region4: #{_train_forward.1} parent=1 // pred_region
      _
    $region5: #{_train_forward.1} parent=1 // pred_fallthru
      _
    // Predicated region
    $region6: #{_train_forward.1} parent=1 // pred_check
      _
    $region7: #{_train_forward.1} parent=1 // pred_check_branch
      %13 = sbr.rel (0) target = $region9
    $region8: #{_train_forward.1} parent=1 // pred_region
      _
    $region9: #{_train_forward.1} parent=1 // pred_fallthru
      _
    // Predicated region
    $region10: #{_train_forward.1} parent=1 // pred_check
      _
    $region11: #{_train_forward.1} parent=1 // pred_check_branch
      %15 = sbr.rel (0) target = $region13
    $region12: #{_train_forward.1} parent=1 // pred_region
      _
    $region13: #{_train_forward.1} parent=1 // pred_fallthru
      _
    // Predicated region
    $region14: #{_train_forward.1} parent=1 // pred_check
      _
    $region15: #{_train_forward.1} parent=1 // pred_check_branch
      %17 = sbr.rel (0) target = $region17
    $region16: #{_train_forward.1} parent=1 // pred_region
      _
    $region17: #{_train_forward.1} parent=1 // pred_fallthru
      _
    %p19 = scmp.eq.s32.totalorder 0, 0
    // Predicated region
    $region18: #{_train_forward.1} parent=1 // pred_check
      %p20 = pneg %p19
    $region19: #{_train_forward.1} parent=1 // pred_check_branch
      %22 = sbr.rel (%p20) target = $region21
    $region20: #{_train_forward.1} parent=1 // pred_region
      %s23 = smul.u32 0, 128
      %s24 = sshra.s32 %s23, 7
      %s25 = sand.u32 %s23, 127
      %s26 = scalar_lea.vmem %s3, %s24
      %v27 = vld [vmem:[%s26] sm:$0x1]
      %v29 = vlaneseq
      %v30 = vshrl.u32 %v29, 7
      %v31 = vsub.s32 0, %v30
      %v32 = vrot.slane %v27, %v31
      %34 = vst [vmem:[#allocation2] sm:$0xff] %v32
    $region21: #{_train_forward.1} parent=1 // pred_fallthru
      _
    %s35 = smul.u32 0, 128
    %s36 = sshra.s32 %s35, 7
    %s37 = sand.u32 %s35, 127
    %s38 = scalar_lea.vmem %s1, %s36
    %v39 = vld [vmem:[%s38] sm:$0x1]
    %v40 = vld [vmem:[%s0] sm:$0xff]
    %v42 = vlaneseq
    %v43 = vshrl.u32 %v42, 7
    %v44 = vsub.s32 0, %v43
    %v45 = vrot.slane %v39, %v44
    %v47 = vmul.f32 %v40, %v45
    %v48 = vpack.c.bf16 %v47, %v47
    %v49 = vld [vmem:[#allocation2] sm:$0xff]
    %v50 = vld [vmem:[%s2] sm:$0xf]
    %v51 = vld [vmem:[%s2 + $0x4] sm:$0xf]
    %v52 = vld [vmem:[%s2 + $0x8] sm:$0xf]
    %v53 = vld [vmem:[%s2 + $0xc] sm:$0xf]
    %v54 = vld [vmem:[%s2 + $0x10] sm:$0xf]
    %v55 = vld [vmem:[%s2 + $0x14] sm:$0xf]
    %v56 = vld [vmem:[%s2 + $0x18] sm:$0xf]
    %v57 = vld [vmem:[%s2 + $0x1c] sm:$0xf]
    %v58 = vld [vmem:[%s2 + $0x20] sm:$0xf]
    %v59 = vld [vmem:[%s2 + $0x24] sm:$0xf]
    %v60 = vld [vmem:[%s2 + $0x28] sm:$0xf]
    %v61 = vld [vmem:[%s2 + $0x2c] sm:$0xf]
    %v62 = vld [vmem:[%s2 + $0x30] sm:$0xf]
    %v63 = vld [vmem:[%s2 + $0x34] sm:$0xf]
    %v64 = vld [vmem:[%s2 + $0x38] sm:$0xf]
    %v65 = vld [vmem:[%s2 + $0x3c] sm:$0xf]
    %v82 = vunpack.c.l.b16 %v50
    %v83 = vunpack.c.l.b16 %v51
    %v84 = vunpack.c.l.b16 %v52
    %v85 = vunpack.c.l.b16 %v53
    %v86 = vunpack.c.l.b16 %v54
    %v87 = vunpack.c.l.b16 %v55
    %v88 = vunpack.c.l.b16 %v56
    %v89 = vunpack.c.l.b16 %v57
    %v90 = vunpack.c.l.b16 %v58
    %v91 = vunpack.c.l.b16 %v59
    %v92 = vunpack.c.l.b16 %v60
    %v93 = vunpack.c.l.b16 %v61
    %v94 = vunpack.c.l.b16 %v62
    %v95 = vunpack.c.l.b16 %v63
    %v96 = vunpack.c.l.b16 %v64
    %v97 = vunpack.c.l.b16 %v65
    %v98 = vpack.c.b16 %v83, %v82
    %v99 = vpack.c.b16 %v85, %v84
    %v100 = vpack.c.b16 %v87, %v86
    %v101 = vpack.c.b16 %v89, %v88
    %v102 = vpack.c.b16 %v91, %v90
    %v103 = vpack.c.b16 %v93, %v92
    %v104 = vpack.c.b16 %v95, %v94
    %v105 = vpack.c.b16 %v97, %v96
    %114 = vmatprep.subr.bf16.mxu0 0
    %115 = vmatpush1.bf16.msra.mxu0 %v105
    %116 = vmatprep.subr.bf16.mxu0 0
    %117 = vmatpush1.bf16.msra.mxu0 %v104
    %118 = vmatprep.subr.bf16.mxu0 0
    %119 = vmatpush1.bf16.msra.mxu0 %v103
    %120 = vmatprep.subr.bf16.mxu0 0
    %121 = vmatpush1.bf16.msra.mxu0 %v102
    %122 = vmatprep.subr.bf16.mxu0 0
    %123 = vmatpush1.bf16.msra.mxu0 %v101
    %124 = vmatprep.subr.bf16.mxu0 0
    %125 = vmatpush1.bf16.msra.mxu0 %v100
    %126 = vmatprep.subr.bf16.mxu0 0
    %127 = vmatpush1.bf16.msra.mxu0 %v99
    %128 = vmatprep.subr.bf16.mxu0 0
    %129 = vmatpush1.bf16.msra.mxu0 %v98
    %130 = vmatprep.subr.bf16.mxu0 0
    %131 = vmatpush2.bf16.msra.mxu0 0
    %132 = vmatprep.subr.bf16.mxu0 0
    %133 = vmatpush2.bf16.msra.mxu0 0
    %134 = vmatprep.subr.bf16.mxu0 0
    %135 = vmatpush2.bf16.msra.mxu0 0
    %136 = vmatprep.subr.bf16.mxu0 0
    %137 = vmatpush2.bf16.msra.mxu0 0
    %138 = vmatprep.subr.bf16.mxu0 0
    %139 = vmatpush2.bf16.msra.mxu0 0
    %140 = vmatprep.subr.bf16.mxu0 0
    %141 = vmatpush2.bf16.msra.mxu0 0
    %142 = vmatprep.subr.bf16.mxu0 0
    %143 = vmatpush2.bf16.msra.mxu0 0
    %144 = vmatprep.subr.bf16.mxu0 0
    %145 = vmatpush2.bf16.msra.mxu0 0
    %146 = vmatprep.mubr.bf16.mxu0 0
    %147 = vmatmul.mubr.bf16.gmra.mxu0 %v48
    %v148 = vpop.f32.mrf.mxu0
    %v149 = vadd.f32 0.0, %v148
    %v150 = vpop.f32.mrf.mxu0
    %v151 = vpop.f32.mrf.mxu0
    %v152 = vpop.f32.mrf.mxu0
    %153 = vdwg.mxu0
    %v154 = vadd.f32 %v49, %v149
    %155 = vst [vmem:[#allocation2] sm:$0xff] %v154
    // Predicated region
    $region22: #{_train_forward.1} parent=1 // pred_check
      %p156 = pneg %p19
    $region23: #{_train_forward.1} parent=1 // pred_check_branch
      %158 = sbr.rel (%p156) target = $region25
    $region24: #{_train_forward.1} parent=1 // pred_region
      %v159 = vld [vmem:[#allocation2] sm:$0xff]
      %160 = vst [vmem:[#allocation3] sm:$0xff] %v159
    $region25: #{_train_forward.1} parent=1 // pred_fallthru
      _
    // Predicated region
    $region26: #{_train_forward.1} parent=1 // pred_check
      _
    $region27: #{_train_forward.1} parent=1 // pred_check_branch
      %162 = sbr.rel (0) target = $region29
    $region28: #{_train_forward.1} parent=1 // pred_region
      %s164 = ssub.s32 128, 128
      %165 = vsyncadd [#allocation4], %s164
      %s167 = sshll.u32 [#allocation3], 4
      %s168 = int_to_ptr.vmem [resolvable:$true] %s167
      %170 = dma.vmem_to_hbm [thread:$0]  %s168, 128, %s4, [#allocation4]
    $region29: #{_train_forward.1} parent=1 // pred_fallthru
      _
    // Predicated region
    $region30: #{_train_forward.1} parent=1 // pred_check
      _
    $region31: #{_train_forward.1} parent=1 // pred_check_branch
      %172 = sbr.rel (0) target = $region33
    $region32: #{_train_forward.1} parent=1 // pred_region
      %173 = dma.done [#allocation4], 128
    $region33: #{_train_forward.1} parent=1 // pred_fallthru
      _
    %174 = vsyncpa [#allocation4], 1

</llo_original>
